<compile_context>
chip_gen: v6e
topology: v6e:2x2x1
jax: 0.10.0
libtpu: 0.0.40
codegen_flags: <defaults>
</compile_context>

<pallas_src>
import functools

import jax
import jax.numpy as jnp
from jax.experimental import pallas as pl
from jax.experimental.pallas import tpu as pltpu


_EPS = 1e-5
_VMEM = pl.BlockSpec(memory_space=pltpu.MemorySpace.VMEM)
_SMEM = pl.BlockSpec(memory_space=pltpu.MemorySpace.SMEM)


def _vmem_limit_bytes():
    """Scoped-VMEM budget: most of physical VMEM minus headroom, per chip gen."""
    try:
        cap = int(pltpu.get_tpu_info().vmem_capacity_bytes)
    except Exception:  # non-TPU backend / interpret mode
        cap = 128 * 1024 * 1024
    return int(min(max(cap - 24 * 1024 * 1024, 32 * 1024 * 1024),
                   100 * 1024 * 1024))


def _round_up(x, m):
    return ((x + m - 1) // m) * m


def _bn_train(x, gamma, beta):
    """BatchNorm1d (training): per-column batch mean / biased var, one pass."""
    mu = jnp.mean(x, axis=0, keepdims=True)
    msq = jnp.mean(x * x, axis=0, keepdims=True)
    var = jnp.maximum(msq - mu * mu, 0.0)
    return (x - mu) * jax.lax.rsqrt(var + _EPS) * gamma + beta


# --------------------------- fused encoder kernel ---------------------------
#
# One kernel for: sensitive-column extraction + masking, input BN (stats only;
# affine folded into W1), both GCN branches packed along lanes, hidden BN,
# packed {mean,logstd} heads, head BN, reparametrization, and the fused
# X_pred / S_agg_pred epilogue.  adj is multiplied only twice (2h and 4h lanes).

def _encoder_kernel(sen_ref, x_ref, adj_ref, noise_ref,
                    w1_ref, b1_ref, w2_ref,
                    gh_ref, bh_ref, gd_ref, bd_ref,
                    wxz_ref, wxs_ref, bx_ref, ws_ref, bs_ref,
                    z_ref, s_ref, xp_ref, sp_ref, *, h_dim, training):
    x = x_ref[...]                                            # (N, C) f32
    n, c = x.shape

    # sensitive column: extract S from the ORIGINAL x, then zero it
    col = jax.lax.broadcasted_iota(jnp.int32, (n, c), 1)
    sen_mask = col == sen_ref[0]
    s = jnp.sum(jnp.where(sen_mask, x, 0.0), axis=1, keepdims=True)  # (N, 1)
    s_ref[...] = s
    x_ns = jnp.where(sen_mask, 0.0, x)

    # input BN: both branches share X_ns -> identical batch statistics; the
    # per-branch affines are folded into w1/b1 in the wrapper.
    mu = jnp.mean(x_ns, axis=0, keepdims=True)
    msq = jnp.mean(x_ns * x_ns, axis=0, keepdims=True)
    var = jnp.maximum(msq - mu * mu, 0.0)
    xhat = (x_ns - mu) * jax.lax.rsqrt(var + _EPS)

    adj = adj_ref[...]                                        # (N, N) bf16

    # layer 1: single K=C, Nout=2h matmul, bias row added BEFORE the adj pass
    xw = jnp.dot(xhat.astype(jnp.bfloat16), w1_ref[...],
                 preferred_element_type=jnp.float32) + b1_ref[...]    # (N, 2h)
    hidden = jnp.dot(adj, xw.astype(jnp.bfloat16),
                     preferred_element_type=jnp.float32)
    hidden = jnp.maximum(hidden, 0.0)
    hidden = _bn_train(hidden, gh_ref[...], bh_ref[...])              # (N, 2h)

    # layer 2: single K=2h, Nout=4h matmul against block-diagonal weight
    # head layout: [mean_a | mean_x | logstd_a | logstd_x]
    hw = jnp.dot(hidden.astype(jnp.bfloat16), w2_ref[...],
                 preferred_element_type=jnp.float32)                  # (N, 4h)
    heads = jnp.dot(adj, hw.astype(jnp.bfloat16),
                    preferred_element_type=jnp.float32)
    heads = _bn_train(heads, gd_ref[...], bd_ref[...])

    mean_p = heads[:, :2 * h_dim]                                     # [ma|mx]
    logstd_p = heads[:, 2 * h_dim:]                                   # [la|lx]
    if training:   # VGAE reparametrization on 2h-wide packed halves
        z = noise_ref[...] * jnp.exp(0.5 * logstd_p) + mean_p
    else:
        z = mean_p
    z_ref[...] = z                                                    # [za|zx]

    # ---- fused epilogue: X_pred and S_agg_pred while everything is resident
    zx = z[:, h_dim:]
    xp_ref[...] = (jnp.dot(zx, wxz_ref[...], preferred_element_type=jnp.float32)
                   + s * wxs_ref[...] + bx_ref[...])
    logits = (jnp.dot(z, ws_ref[...], preferred_element_type=jnp.float32)
              + bs_ref[...])
    logits = logits - jnp.max(logits, axis=-1, keepdims=True)
    e = jnp.exp(logits)
    sp_ref[...] = e / jnp.sum(e, axis=-1, keepdims=True)   # exact (feeds CE)


def fused_encoder(X, adj_bf16, sen_idx, noise_packed, pa, px,
                  wxz, wxs, bx, ws, bs, *, training=True):
    n, c = X.shape
    h = pa["w1"].shape[1]

    # fold input-BN affine into packed layer-1 weight/bias (one wide matmul)
    w1 = jnp.concatenate([pa["bn_in_g"][:, None] * pa["w1"],
                          px["bn_in_g"][:, None] * px["w1"]],
                         axis=1).astype(jnp.bfloat16)                  # (C, 2h)
    b1 = jnp.concatenate([pa["bn_in_b"] @ pa["w1"],
                          px["bn_in_b"] @ px["w1"]]).reshape(1, 2 * h)

    # block-diagonal layer-2 weight, head layout [mean_a|mean_x|logstd_a|logstd_x]
    zeros = jnp.zeros((h, h), jnp.float32)
    w2_top = jnp.concatenate([pa["w_mean"], zeros, pa["w_logstd"], zeros], axis=1)
    w2_bot = jnp.concatenate([zeros, px["w_mean"], zeros, px["w_logstd"]], axis=1)
    w2 = jnp.concatenate([w2_top, w2_bot], axis=0).astype(jnp.bfloat16)  # (2h,4h)

    gh = jnp.concatenate([pa["bn_h_g"], px["bn_h_g"]]).reshape(1, 2 * h)
    bh = jnp.concatenate([pa["bn_h_b"], px["bn_h_b"]]).reshape(1, 2 * h)
    gd = jnp.concatenate([pa["bn_m_g"], px["bn_m_g"],
                          pa["bn_d_g"], px["bn_d_g"]]).reshape(1, 4 * h)
    bd = jnp.concatenate([pa["bn_m_b"], px["bn_m_b"],
                          pa["bn_d_b"], px["bn_d_b"]]).reshape(1, 4 * h)

    sen = jnp.asarray([sen_idx], dtype=jnp.int32)

    kernel = functools.partial(_encoder_kernel, h_dim=h, training=training)
    out_shapes = (jax.ShapeDtypeStruct((n, 2 * h), jnp.float32),   # [Z_a|Z_x]
                  jax.ShapeDtypeStruct((n, 1), jnp.float32),       # S
                  jax.ShapeDtypeStruct((n, c), jnp.float32),       # X_pred
                  jax.ShapeDtypeStruct((n, ws.shape[1]), jnp.float32))  # S_agg
    return pl.pallas_call(
        kernel,
        out_shape=out_shapes,
        in_specs=[_SMEM] + [_VMEM] * 15,
        out_specs=(_VMEM, _VMEM, _VMEM, _VMEM),
        compiler_params=pltpu.CompilerParams(
            vmem_limit_bytes=_vmem_limit_bytes()),
    )(sen, X, adj_bf16, noise_packed,
      w1, b1, w2, gh, bh, gd, bd,
      wxz, wxs, bx, ws, bs)


# --------------------------- tiled pred_a kernel -----------------------------

def _pred_a_kernel(z_ref, s_ref, w_ref, ws_ref, b_ref, o_ref):
    # sigmoid(Z @ W[:h] + S * W[h] + b)   — rank-1 S update, no concat matmul
    y = jnp.dot(z_ref[...], w_ref[...], preferred_element_type=jnp.float32)
    y = y + s_ref[...] * ws_ref[...] + b_ref[...]
    # exp + reciprocal both route to the EUP slot on the N^2 hot path
    o_ref[...] = pl.reciprocal(1.0 + jnp.exp(-y), approx=True)


def pred_adj(z_a, s, w_z, w_s, b):
    n, h = z_a.shape
    n_out = w_z.shape[1]

    tm = min(256, _round_up(n, 8))          # row tile
    tn = min(2048, _round_up(n_out, 128))   # lane-dense col tile
    n_pad = _round_up(n, tm)
    nout_pad = _round_up(n_out, tn)

    z_p, s_p = z_a, s
    if n_pad != n:
        z_p = jnp.pad(z_a, ((0, n_pad - n), (0, 0)))
        s_p = jnp.pad(s, ((0, n_pad - n), (0, 0)))
    w_zp, w_sp, b_p = w_z, w_s, b
    if nout_pad != n_out:
        w_zp = jnp.pad(w_z, ((0, 0), (0, nout_pad - n_out)))
        w_sp = jnp.pad(w_s, ((0, 0), (0, nout_pad - n_out)))
        b_p = jnp.pad(b, ((0, 0), (0, nout_pad - n_out)))

    # pre-cast matmul operands once (they are re-DMA'd every grid step)
    z_p = z_p.astype(jnp.bfloat16)
    w_zp = w_zp.astype(jnp.bfloat16)

    out = pl.pallas_call(
        _pred_a_kernel,
        out_shape=jax.ShapeDtypeStruct((n_pad, nout_pad), jnp.float32),
        grid=(n_pad // tm, nout_pad // tn),
        in_specs=[
            pl.BlockSpec((tm, h), lambda i, j: (i, 0)),
            pl.BlockSpec((tm, 1), lambda i, j: (i, 0)),
            pl.BlockSpec((h, tn), lambda i, j: (0, j)),
            pl.BlockSpec((1, tn), lambda i, j: (0, j)),
            pl.BlockSpec((1, tn), lambda i, j: (0, j)),
        ],
        out_specs=pl.BlockSpec((tm, tn), lambda i, j: (i, j)),
        compiler_params=pltpu.CompilerParams(
            dimension_semantics=("parallel", "parallel"),
            vmem_limit_bytes=_vmem_limit_bytes()),
    )(z_p, s_p, w_zp, w_sp, b_p)

    if n_pad != n or nout_pad != n_out:
        out = out[:n, :n_out]
    return out


# ----------------------------- parameter init -------------------------------

def glorot_init(key, in_dim, out_dim):
    r = jnp.sqrt(6.0 / (in_dim + out_dim))
    return jax.random.uniform(key, (in_dim, out_dim), jnp.float32, -r, r)


def linear_init(key, in_dim, out_dim):
    # PyTorch nn.Linear default: U(-1/sqrt(in), 1/sqrt(in)) for weight and bias.
    k_w, k_b = jax.random.split(key)
    bound = 1.0 / jnp.sqrt(float(in_dim))
    w = jax.random.uniform(k_w, (in_dim, out_dim), jnp.float32, -bound, bound)
    b = jax.random.uniform(k_b, (out_dim,), jnp.float32, -bound, bound)
    return w, b


def init_cfda_params(key, h_dim, input_dim, n_nodes, s_num=4):
    ks = jax.random.split(key, 8)

    def bn(c):
        return jnp.ones((c,), jnp.float32), jnp.zeros((c,), jnp.float32)

    def branch(k):
        k1, k2, k3 = jax.random.split(k, 3)
        g_in, b_in = bn(input_dim)
        g_h, b_h = bn(h_dim)
        g_m, b_m = bn(h_dim)
        g_d, b_d = bn(h_dim)
        return dict(
            w1=glorot_init(k1, input_dim, h_dim),
            w_mean=glorot_init(k2, h_dim, h_dim),
            w_logstd=glorot_init(k3, h_dim, h_dim),
            bn_in_g=g_in, bn_in_b=b_in,
            bn_h_g=g_h, bn_h_b=b_h,
            bn_m_g=g_m, bn_m_b=b_m,
            bn_d_g=g_d, bn_d_b=b_d,
        )

    pa_w, pa_b = linear_init(ks[2], h_dim + 1, n_nodes)       # pred_a
    rx_w, rx_b = linear_init(ks[3], h_dim + 1, input_dim)     # reconst_X
    ps_w, ps_b = linear_init(ks[4], 2 * h_dim, s_num)         # pred_s
    return dict(
        A=branch(ks[0]),
        X=branch(ks[1]),
        pred_a_w=pa_w, pred_a_b=pa_b,
        reconst_x_w=rx_w, reconst_x_b=rx_b,
        pred_s_w=ps_w, pred_s_b=ps_b,
    )


# ----------------------------- forward --------------------------------------

def cfda_forward(params, X, adj, sen_idx, noise_a, noise_x, training=True):
    h = params["A"]["w1"].shape[1]

    # adjacency values ({0, 0.5, 1, 1.5, 2}) are exact in bf16
    adj_bf16 = adj.astype(jnp.bfloat16)
    noise_packed = jnp.concatenate([noise_a, noise_x], axis=1)

    # fused kernel: masking, S extraction, both encoder branches, reparam,
    # plus the X_pred / S_agg_pred epilogue.
    z_packed, S, X_pred, S_agg_pred = fused_encoder(
        X, adj_bf16, sen_idx, noise_packed, params["A"], params["X"],
        params["reconst_x_w"][:h],
        params["reconst_x_w"][h:h + 1],
        params["reconst_x_b"].reshape(1, -1),
        params["pred_s_w"],
        params["pred_s_b"].reshape(1, -1),
        training=training)

    # A_pred: tiled (N x N) kernel, rank-1 S update instead of concat matmul
    Z_a = z_packed[:, :h]
    A_pred = pred_adj(Z_a, S,
                      params["pred_a_w"][:h],
                      params["pred_a_w"][h:h + 1],
                      params["pred_a_b"].reshape(1, -1))
    return A_pred, X_pred, S_agg_pred


# ----------------------------- pure-JAX reference ----------------------------

def reference_forward(params, X, adj, sen_idx, noise_a, noise_x):
    def bn(x, g, b):
        mu = jnp.mean(x, axis=0, keepdims=True)
        var = jnp.mean((x - mu) ** 2, axis=0, keepdims=True)
        return (x - mu) / jnp.sqrt(var + _EPS) * g + b

    S = X[:, sen_idx:sen_idx + 1]
    X_ns = X.at[:, sen_idx].set(0.0)

    def encode(p, noise):
        x = bn(X_ns, p["bn_in_g"], p["bn_in_b"])
        hidden = jnp.maximum(adj @ (x @ p["w1"]), 0.0)
        hidden = bn(hidden, p["bn_h_g"], p["bn_h_b"])
        mean = bn(adj @ (hidden @ p["w_mean"]), p["bn_m_g"], p["bn_m_b"])
        logstd = bn(adj @ (hidden @ p["w_logstd"]), p["bn_d_g"], p["bn_d_b"])
        return noise * jnp.exp(0.5 * logstd) + mean

    Z_a = encode(params["A"], noise_a)
    Z_x = encode(params["X"], noise_x)
    A_pred = jax.nn.sigmoid(
        jnp.concatenate([Z_a, S], 1) @ params["pred_a_w"] + params["pred_a_b"])
    X_pred = (jnp.concatenate([Z_x, S], 1) @ params["reconst_x_w"]
              + params["reconst_x_b"])
    S_agg = jax.nn.softmax(
        jnp.concatenate([Z_a, Z_x], 1) @ params["pred_s_w"] + params["pred_s_b"],
        axis=1)
    return A_pred, X_pred, S_agg


# ----------------------------- main ------------------------------------------

if __name__ == "__main__":
    N_NODES = 8       # number of graph nodes (adj is N x N)
    INPUT_DIM = 16
    H_DIM = 32
    SEN_IDX = 3

    key = jax.random.PRNGKey(0)
    k_x, k_adj, k_p, k_na, k_nx = jax.random.split(key, 5)

    X = jax.random.normal(k_x, (N_NODES, INPUT_DIM), jnp.float32)
    # symmetric dense adjacency with self-loops (stand-in for the sparse adj)
    A_raw = (jax.random.uniform(k_adj, (N_NODES, N_NODES)) > 0.5).astype(jnp.float32)
    adj = (A_raw + A_raw.T) * 0.5 + jnp.eye(N_NODES, dtype=jnp.float32)

    params = init_cfda_params(k_p, H_DIM, INPUT_DIM, N_NODES)
    noise_a = jax.random.normal(k_na, (N_NODES, H_DIM), jnp.float32)
    noise_x = jax.random.normal(k_nx, (N_NODES, H_DIM), jnp.float32)

    A_pred, X_pred, S_agg_pred = cfda_forward(
        params, X, adj, SEN_IDX, noise_a, noise_x, training=True)
    jax.block_until_ready((A_pred, X_pred, S_agg_pred))

    assert A_pred.shape == (N_NODES, N_NODES)
    assert X_pred.shape == (N_NODES, INPUT_DIM)
    assert S_agg_pred.shape == (N_NODES, 4)
    assert bool(jnp.all(jnp.isfinite(A_pred)))
    assert bool(jnp.all(jnp.isfinite(X_pred)))
    assert bool(jnp.all(jnp.isfinite(S_agg_pred)))
    # softmax rows sum to 1 (exact division in kernel)
    assert bool(jnp.all(jnp.abs(jnp.sum(S_agg_pred, axis=1) - 1.0) < 1e-3))

    # loose agreement with a pure f32 JAX reference (kernel uses bf16 matmuls
    # and an EUP-approx sigmoid, so tolerances are deliberately generous)
    A_ref, X_ref, S_ref = reference_forward(params, X, adj, SEN_IDX,
                                            noise_a, noise_x)
    assert float(jnp.max(jnp.abs(A_pred - A_ref))) < 0.1
    assert float(jnp.max(jnp.abs(X_pred - X_ref))) < 0.3
    assert float(jnp.max(jnp.abs(S_agg_pred - S_ref))) < 0.1

    print("KERNEL_OK")
</pallas_src>

<mosaic_0001>
module attributes {stable_mosaic.version = 11 : i64} {
  func.func @_encoder_kernel(%arg0: memref<1xi32, #tpu.memory_space<smem>>, %arg1: memref<8x16xf32, #tpu.memory_space<vmem>>, %arg2: memref<8x8xbf16, #tpu.memory_space<vmem>>, %arg3: memref<8x64xf32, #tpu.memory_space<vmem>>, %arg4: memref<16x64xbf16, #tpu.memory_space<vmem>>, %arg5: memref<1x64xf32, #tpu.memory_space<vmem>>, %arg6: memref<64x128xbf16, #tpu.memory_space<vmem>>, %arg7: memref<1x64xf32, #tpu.memory_space<vmem>>, %arg8: memref<1x64xf32, #tpu.memory_space<vmem>>, %arg9: memref<1x128xf32, #tpu.memory_space<vmem>>, %arg10: memref<1x128xf32, #tpu.memory_space<vmem>>, %arg11: memref<32x16xf32, #tpu.memory_space<vmem>>, %arg12: memref<1x16xf32, #tpu.memory_space<vmem>>, %arg13: memref<1x16xf32, #tpu.memory_space<vmem>>, %arg14: memref<64x4xf32, #tpu.memory_space<vmem>>, %arg15: memref<1x4xf32, #tpu.memory_space<vmem>>, %arg16: memref<8x64xf32, #tpu.memory_space<vmem>>, %arg17: memref<8x1xf32, #tpu.memory_space<vmem>>, %arg18: memref<8x16xf32, #tpu.memory_space<vmem>>, %arg19: memref<8x4xf32, #tpu.memory_space<vmem>>) attributes {dimension_semantics = [], scalar_prefetch = 0 : i64, scratch_operands = 0 : i64, tpu.core_type = #tpu.core_type<tc>} {
    %c0 = arith.constant 0 : index
    %c0_0 = arith.constant 0 : index
    %0 = vector.load %arg1[%c0, %c0_0] : memref<8x16xf32, #tpu.memory_space<vmem>>, vector<8x16xf32>
    %1 = tpu.iota {dimensions = array<i32: 1>} : vector<8x16xi32>
    %c0_1 = arith.constant 0 : index
    %2 = memref.load %arg0[%c0_1] : memref<1xi32, #tpu.memory_space<smem>>
    %3 = vector.broadcast %2 : i32 to vector<8x16xi32>
    %4 = arith.cmpi eq, %1, %3 : vector<8x16xi32>
    %cst = arith.constant 0.000000e+00 : f32
    %5 = vector.broadcast %cst : f32 to vector<8x16xf32>
    %6 = arith.select %4, %0, %5 : vector<8x16xi1>, vector<8x16xf32>
    %cst_2 = arith.constant dense<0.000000e+00> : vector<8xf32>
    %7 = vector.multi_reduction <add>, %6, %cst_2 [1] : vector<8x16xf32> to vector<8xf32>
    %8 = vector.shape_cast %7 : vector<8xf32> to vector<8x1xf32>
    %c0_3 = arith.constant 0 : index
    %c0_4 = arith.constant 0 : index
    %9 = vector.load %arg17[%c0_3, %c0_4] : memref<8x1xf32, #tpu.memory_space<vmem>>, vector<8x1xf32>
    tpu.vector_store %arg17[%c0_3, %c0_4], %8 {strides = array<i32>} : memref<8x1xf32, #tpu.memory_space<vmem>>, vector<8x1xf32>,
    %cst_5 = arith.constant 0.000000e+00 : f32
    %10 = vector.broadcast %cst_5 : f32 to vector<8x16xf32>
    %11 = arith.select %4, %10, %0 : vector<8x16xi1>, vector<8x16xf32>
    %cst_6 = arith.constant dense<0.000000e+00> : vector<16xf32>
    %12 = vector.multi_reduction <add>, %11, %cst_6 [0] : vector<8x16xf32> to vector<16xf32>
    %13 = vector.shape_cast %12 : vector<16xf32> to vector<1x16xf32>
    %cst_7 = arith.constant 8.000000e+00 : f32
    %14 = vector.broadcast %cst_7 : f32 to vector<1x16xf32>
    %15 = arith.divf %13, %14 : vector<1x16xf32>
    %16 = arith.mulf %11, %11 : vector<8x16xf32>
    %cst_8 = arith.constant dense<0.000000e+00> : vector<16xf32>
    %17 = vector.multi_reduction <add>, %16, %cst_8 [0] : vector<8x16xf32> to vector<16xf32>
    %18 = vector.shape_cast %17 : vector<16xf32> to vector<1x16xf32>
    %cst_9 = arith.constant 8.000000e+00 : f32
    %19 = vector.broadcast %cst_9 : f32 to vector<1x16xf32>
    %20 = arith.divf %18, %19 : vector<1x16xf32>
    %21 = arith.mulf %15, %15 : vector<1x16xf32>
    %22 = arith.subf %20, %21 : vector<1x16xf32>
    %cst_10 = arith.constant 0.000000e+00 : f32
    %23 = vector.broadcast %cst_10 : f32 to vector<1x16xf32>
    %24 = arith.maximumf %22, %23 : vector<1x16xf32>
    %25 = vector.broadcast %15 : vector<1x16xf32> to vector<8x16xf32>
    %26 = arith.subf %11, %25 : vector<8x16xf32>
    %cst_11 = arith.constant 9.99999974E-6 : f32
    %27 = vector.broadcast %cst_11 : f32 to vector<1x16xf32>
    %28 = arith.addf %24, %27 : vector<1x16xf32>
    %29 = math.rsqrt %28 : vector<1x16xf32>
    %30 = vector.broadcast %29 : vector<1x16xf32> to vector<8x16xf32>
    %31 = arith.mulf %26, %30 : vector<8x16xf32>
    %c0_12 = arith.constant 0 : index
    %c0_13 = arith.constant 0 : index
    %32 = vector.load %arg2[%c0_12, %c0_13] : memref<8x8xbf16, #tpu.memory_space<vmem>>, vector<8x8xbf16>
    %33 = arith.truncf %31 : vector<8x16xf32> to vector<8x16xbf16>
    %c0_14 = arith.constant 0 : index
    %c0_15 = arith.constant 0 : index
    %34 = vector.load %arg4[%c0_14, %c0_15] : memref<16x64xbf16, #tpu.memory_space<vmem>>, vector<16x64xbf16>
    %cst_16 = arith.constant dense<0.000000e+00> : vector<8x64xf32>
    %35 = tpu.matmul %33, %34, %cst_16 {dimension_numbers = #tpu.dot_dimension_numbers<[1], [0], [0], [1], [0, 0, 1, 1], [], []>} : vector<8x16xbf16>, vector<16x64xbf16>, vector<8x64xf32> -> vector<8x64xf32>
    %c0_17 = arith.constant 0 : index
    %c0_18 = arith.constant 0 : index
    %36 = vector.load %arg5[%c0_17, %c0_18] : memref<1x64xf32, #tpu.memory_space<vmem>>, vector<1x64xf32>
    %37 = vector.broadcast %36 : vector<1x64xf32> to vector<8x64xf32>
    %38 = arith.addf %35, %37 : vector<8x64xf32>
    %39 = arith.truncf %38 : vector<8x64xf32> to vector<8x64xbf16>
    %cst_19 = arith.constant dense<0.000000e+00> : vector<8x64xf32>
    %40 = tpu.matmul %32, %39, %cst_19 {dimension_numbers = #tpu.dot_dimension_numbers<[1], [0], [0], [1], [0, 0, 1, 1], [], []>} : vector<8x8xbf16>, vector<8x64xbf16>, vector<8x64xf32> -> vector<8x64xf32>
    %cst_20 = arith.constant 0.000000e+00 : f32
    %41 = vector.broadcast %cst_20 : f32 to vector<8x64xf32>
    %42 = arith.maximumf %40, %41 : vector<8x64xf32>
    %c0_21 = arith.constant 0 : index
    %c0_22 = arith.constant 0 : index
    %43 = vector.load %arg7[%c0_21, %c0_22] : memref<1x64xf32, #tpu.memory_space<vmem>>, vector<1x64xf32>
    %c0_23 = arith.constant 0 : index
    %c0_24 = arith.constant 0 : index
    %44 = vector.load %arg8[%c0_23, %c0_24] : memref<1x64xf32, #tpu.memory_space<vmem>>, vector<1x64xf32>
    %cst_25 = arith.constant dense<0.000000e+00> : vector<64xf32>
    %45 = vector.multi_reduction <add>, %42, %cst_25 [0] : vector<8x64xf32> to vector<64xf32>
    %46 = vector.shape_cast %45 : vector<64xf32> to vector<1x64xf32>
    %cst_26 = arith.constant 8.000000e+00 : f32
    %47 = vector.broadcast %cst_26 : f32 to vector<1x64xf32>
    %48 = arith.divf %46, %47 : vector<1x64xf32>
    %49 = arith.mulf %42, %42 : vector<8x64xf32>
    %cst_27 = arith.constant dense<0.000000e+00> : vector<64xf32>
    %50 = vector.multi_reduction <add>, %49, %cst_27 [0] : vector<8x64xf32> to vector<64xf32>
    %51 = vector.shape_cast %50 : vector<64xf32> to vector<1x64xf32>
    %cst_28 = arith.constant 8.000000e+00 : f32
    %52 = vector.broadcast %cst_28 : f32 to vector<1x64xf32>
    %53 = arith.divf %51, %52 : vector<1x64xf32>
    %54 = arith.mulf %48, %48 : vector<1x64xf32>
    %55 = arith.subf %53, %54 : vector<1x64xf32>
    %cst_29 = arith.constant 0.000000e+00 : f32
    %56 = vector.broadcast %cst_29 : f32 to vector<1x64xf32>
    %57 = arith.maximumf %55, %56 : vector<1x64xf32>
    %58 = vector.broadcast %48 : vector<1x64xf32> to vector<8x64xf32>
    %59 = arith.subf %42, %58 : vector<8x64xf32>
    %cst_30 = arith.constant 9.99999974E-6 : f32
    %60 = vector.broadcast %cst_30 : f32 to vector<1x64xf32>
    %61 = arith.addf %57, %60 : vector<1x64xf32>
    %62 = math.rsqrt %61 : vector<1x64xf32>
    %63 = vector.broadcast %62 : vector<1x64xf32> to vector<8x64xf32>
    %64 = arith.mulf %59, %63 : vector<8x64xf32>
    %65 = vector.broadcast %43 : vector<1x64xf32> to vector<8x64xf32>
    %66 = arith.mulf %64, %65 : vector<8x64xf32>
    %67 = vector.broadcast %44 : vector<1x64xf32> to vector<8x64xf32>
    %68 = arith.addf %66, %67 : vector<8x64xf32>
    %69 = arith.truncf %68 : vector<8x64xf32> to vector<8x64xbf16>
    %c0_31 = arith.constant 0 : index
    %c0_32 = arith.constant 0 : index
    %70 = vector.load %arg6[%c0_31, %c0_32] : memref<64x128xbf16, #tpu.memory_space<vmem>>, vector<64x128xbf16>
    %cst_33 = arith.constant dense<0.000000e+00> : vector<8x128xf32>
    %71 = tpu.matmul %69, %70, %cst_33 {dimension_numbers = #tpu.dot_dimension_numbers<[1], [0], [0], [1], [0, 0, 1, 1], [], []>} : vector<8x64xbf16>, vector<64x128xbf16>, vector<8x128xf32> -> vector<8x128xf32>
    %72 = arith.truncf %71 : vector<8x128xf32> to vector<8x128xbf16>
    %cst_34 = arith.constant dense<0.000000e+00> : vector<8x128xf32>
    %73 = tpu.matmul %32, %72, %cst_34 {dimension_numbers = #tpu.dot_dimension_numbers<[1], [0], [0], [1], [0, 0, 1, 1], [], []>} : vector<8x8xbf16>, vector<8x128xbf16>, vector<8x128xf32> -> vector<8x128xf32>
    %c0_35 = arith.constant 0 : index
    %c0_36 = arith.constant 0 : index
    %74 = vector.load %arg9[%c0_35, %c0_36] : memref<1x128xf32, #tpu.memory_space<vmem>>, vector<1x128xf32>
    %c0_37 = arith.constant 0 : index
    %c0_38 = arith.constant 0 : index
    %75 = vector.load %arg10[%c0_37, %c0_38] : memref<1x128xf32, #tpu.memory_space<vmem>>, vector<1x128xf32>
    %cst_39 = arith.constant dense<0.000000e+00> : vector<128xf32>
    %76 = vector.multi_reduction <add>, %73, %cst_39 [0] : vector<8x128xf32> to vector<128xf32>
    %77 = vector.shape_cast %76 : vector<128xf32> to vector<1x128xf32>
    %cst_40 = arith.constant 8.000000e+00 : f32
    %78 = vector.broadcast %cst_40 : f32 to vector<1x128xf32>
    %79 = arith.divf %77, %78 : vector<1x128xf32>
    %80 = arith.mulf %73, %73 : vector<8x128xf32>
    %cst_41 = arith.constant dense<0.000000e+00> : vector<128xf32>
    %81 = vector.multi_reduction <add>, %80, %cst_41 [0] : vector<8x128xf32> to vector<128xf32>
    %82 = vector.shape_cast %81 : vector<128xf32> to vector<1x128xf32>
    %cst_42 = arith.constant 8.000000e+00 : f32
    %83 = vector.broadcast %cst_42 : f32 to vector<1x128xf32>
    %84 = arith.divf %82, %83 : vector<1x128xf32>
    %85 = arith.mulf %79, %79 : vector<1x128xf32>
    %86 = arith.subf %84, %85 : vector<1x128xf32>
    %cst_43 = arith.constant 0.000000e+00 : f32
    %87 = vector.broadcast %cst_43 : f32 to vector<1x128xf32>
    %88 = arith.maximumf %86, %87 : vector<1x128xf32>
    %89 = vector.broadcast %79 : vector<1x128xf32> to vector<8x128xf32>
    %90 = arith.subf %73, %89 : vector<8x128xf32>
    %cst_44 = arith.constant 9.99999974E-6 : f32
    %91 = vector.broadcast %cst_44 : f32 to vector<1x128xf32>
    %92 = arith.addf %88, %91 : vector<1x128xf32>
    %93 = math.rsqrt %92 : vector<1x128xf32>
    %94 = vector.broadcast %93 : vector<1x128xf32> to vector<8x128xf32>
    %95 = arith.mulf %90, %94 : vector<8x128xf32>
    %96 = vector.broadcast %74 : vector<1x128xf32> to vector<8x128xf32>
    %97 = arith.mulf %95, %96 : vector<8x128xf32>
    %98 = vector.broadcast %75 : vector<1x128xf32> to vector<8x128xf32>
    %99 = arith.addf %97, %98 : vector<8x128xf32>
    %100 = vector.extract_strided_slice %99 {offsets = [0, 0], sizes = [8, 64], strides = [1, 1]} : vector<8x128xf32> to vector<8x64xf32>
    %101 = vector.extract_strided_slice %99 {offsets = [0, 64], sizes = [8, 64], strides = [1, 1]} : vector<8x128xf32> to vector<8x64xf32>
    %c0_45 = arith.constant 0 : index
    %c0_46 = arith.constant 0 : index
    %102 = vector.load %arg3[%c0_45, %c0_46] : memref<8x64xf32, #tpu.memory_space<vmem>>, vector<8x64xf32>
    %cst_47 = arith.constant 5.000000e-01 : f32
    %103 = vector.broadcast %cst_47 : f32 to vector<8x64xf32>
    %104 = arith.mulf %103, %101 : vector<8x64xf32>
    %105 = math.exp %104 : vector<8x64xf32>
    %106 = arith.mulf %102, %105 : vector<8x64xf32>
    %107 = arith.addf %106, %100 : vector<8x64xf32>
    %c0_48 = arith.constant 0 : index
    %c0_49 = arith.constant 0 : index
    %108 = vector.load %arg16[%c0_48, %c0_49] : memref<8x64xf32, #tpu.memory_space<vmem>>, vector<8x64xf32>
    tpu.vector_store %arg16[%c0_48, %c0_49], %107 {strides = array<i32>} : memref<8x64xf32, #tpu.memory_space<vmem>>, vector<8x64xf32>,
    %109 = vector.extract_strided_slice %107 {offsets = [0, 32], sizes = [8, 32], strides = [1, 1]} : vector<8x64xf32> to vector<8x32xf32>
    %c0_50 = arith.constant 0 : index
    %c0_51 = arith.constant 0 : index
    %110 = vector.load %arg11[%c0_50, %c0_51] : memref<32x16xf32, #tpu.memory_space<vmem>>, vector<32x16xf32>
    %cst_52 = arith.constant dense<0.000000e+00> : vector<8x16xf32>
    %111 = tpu.matmul %109, %110, %cst_52 {dimension_numbers = #tpu.dot_dimension_numbers<[1], [0], [0], [1], [0, 0, 1, 1], [], []>} : vector<8x32xf32>, vector<32x16xf32>, vector<8x16xf32> -> vector<8x16xf32>
    %c0_53 = arith.constant 0 : index
    %c0_54 = arith.constant 0 : index
    %112 = vector.load %arg12[%c0_53, %c0_54] : memref<1x16xf32, #tpu.memory_space<vmem>>, vector<1x16xf32>
    %113 = vector.broadcast %8 : vector<8x1xf32> to vector<8x16xf32>
    %114 = vector.broadcast %112 : vector<1x16xf32> to vector<8x16xf32>
    %115 = arith.mulf %113, %114 : vector<8x16xf32>
    %116 = arith.addf %111, %115 : vector<8x16xf32>
    %c0_55 = arith.constant 0 : index
    %c0_56 = arith.constant 0 : index
    %117 = vector.load %arg13[%c0_55, %c0_56] : memref<1x16xf32, #tpu.memory_space<vmem>>, vector<1x16xf32>
    %118 = vector.broadcast %117 : vector<1x16xf32> to vector<8x16xf32>
    %119 = arith.addf %116, %118 : vector<8x16xf32>
    %c0_57 = arith.constant 0 : index
    %c0_58 = arith.constant 0 : index
    %120 = vector.load %arg18[%c0_57, %c0_58] : memref<8x16xf32, #tpu.memory_space<vmem>>, vector<8x16xf32>
    tpu.vector_store %arg18[%c0_57, %c0_58], %119 {strides = array<i32>} : memref<8x16xf32, #tpu.memory_space<vmem>>, vector<8x16xf32>,
    %c0_59 = arith.constant 0 : index
    %c0_60 = arith.constant 0 : index
    %121 = vector.load %arg14[%c0_59, %c0_60] : memref<64x4xf32, #tpu.memory_space<vmem>>, vector<64x4xf32>
    %cst_61 = arith.constant dense<0.000000e+00> : vector<8x4xf32>
    %122 = tpu.matmul %107, %121, %cst_61 {dimension_numbers = #tpu.dot_dimension_numbers<[1], [0], [0], [1], [0, 0, 1, 1], [], []>} : vector<8x64xf32>, vector<64x4xf32>, vector<8x4xf32> -> vector<8x4xf32>
    %c0_62 = arith.constant 0 : index
    %c0_63 = arith.constant 0 : index
    %123 = vector.load %arg15[%c0_62, %c0_63] : memref<1x4xf32, #tpu.memory_space<vmem>>, vector<1x4xf32>
    %124 = vector.broadcast %123 : vector<1x4xf32> to vector<8x4xf32>
    %125 = arith.addf %122, %124 : vector<8x4xf32>
    %cst_64 = arith.constant dense<0xFF800000> : vector<8xf32>
    %126 = vector.multi_reduction <maximumf>, %125, %cst_64 [1] : vector<8x4xf32> to vector<8xf32>
    %127 = vector.shape_cast %126 : vector<8xf32> to vector<8x1xf32>
    %128 = vector.broadcast %127 : vector<8x1xf32> to vector<8x4xf32>
    %129 = arith.subf %125, %128 : vector<8x4xf32>
    %130 = math.exp %129 : vector<8x4xf32>
    %cst_65 = arith.constant dense<0.000000e+00> : vector<8xf32>
    %131 = vector.multi_reduction <add>, %130, %cst_65 [1] : vector<8x4xf32> to vector<8xf32>
    %132 = vector.shape_cast %131 : vector<8xf32> to vector<8x1xf32>
    %133 = vector.broadcast %132 : vector<8x1xf32> to vector<8x4xf32>
    %134 = arith.divf %130, %133 : vector<8x4xf32>
    %c0_66 = arith.constant 0 : index
    %c0_67 = arith.constant 0 : index
    %135 = vector.load %arg19[%c0_66, %c0_67] : memref<8x4xf32, #tpu.memory_space<vmem>>, vector<8x4xf32>
    tpu.vector_store %arg19[%c0_66, %c0_67], %134 {strides = array<i32>} : memref<8x4xf32, #tpu.memory_space<vmem>>, vector<8x4xf32>,
    return
  }
}

</mosaic_0001>

<llo_original>
// kernel: tpu_custom_call.1
$region0: #{tpu_custom_call.1}
  #allocation0 [shape = 'u32[]', space=smem, size = 0x4, offset = 0x4, fixed_abs, tag = 'smem constant byte address 0x4 - core index']
  #allocation1 [shape = 'u32[144,128]{1,0:T(1,128)}', space=vmem, size = 0x12000, scoped, tag = 'internal scratch']
  #allocation2 [shape = 's32[1]{0:T(128)S(6)}', space=smem, size = 0x200, scoped, tag = 'scoped memory for tpu_custom_call.1']
  %s0 = inlined_call_operand.<no memory space> [shape: s32[1], index: 0, kind: input, shape index: {}]
  %s1 = inlined_call_operand.vmem [shape: f32[8,16], index: 1, kind: input, shape index: {}]
  %s2 = inlined_call_operand.vmem [shape: bf16[8,8], index: 2, kind: input, shape index: {}]
  %s3 = inlined_call_operand.vmem [shape: f32[8,64], index: 3, kind: input, shape index: {}]
  %s4 = inlined_call_operand.vmem [shape: bf16[16,64], index: 4, kind: input, shape index: {}]
  %s5 = inlined_call_operand.vmem [shape: f32[1,64], index: 5, kind: input, shape index: {}]
  %s6 = inlined_call_operand.vmem [shape: bf16[64,128], index: 6, kind: input, shape index: {}]
  %s7 = inlined_call_operand.vmem [shape: f32[1,64], index: 7, kind: input, shape index: {}]
  %s8 = inlined_call_operand.vmem [shape: f32[1,64], index: 8, kind: input, shape index: {}]
  %s9 = inlined_call_operand.vmem [shape: f32[1,128], index: 9, kind: input, shape index: {}]
  %s10 = inlined_call_operand.vmem [shape: f32[1,128], index: 10, kind: input, shape index: {}]
  %s11 = inlined_call_operand.vmem [shape: f32[32,16], index: 11, kind: input, shape index: {}]
  %s12 = inlined_call_operand.vmem [shape: f32[1,16], index: 12, kind: input, shape index: {}]
  %s13 = inlined_call_operand.vmem [shape: f32[1,16], index: 13, kind: input, shape index: {}]
  %s14 = inlined_call_operand.vmem [shape: f32[64,4], index: 14, kind: input, shape index: {}]
  %s15 = inlined_call_operand.vmem [shape: f32[1,4], index: 15, kind: input, shape index: {}]
  %s16 = inlined_call_operand.hbm [shape: f32[8,64], index: 16, kind: output, shape index: {0}]
  %s17 = inlined_call_operand.vmem [shape: f32[8,1], index: 17, kind: output, shape index: {1}]
  %s18 = inlined_call_operand.hbm [shape: f32[8,16], index: 18, kind: output, shape index: {2}]
  %s19 = inlined_call_operand.vmem [shape: f32[8,4], index: 19, kind: output, shape index: {3}]
  %20 = xla_tuple %s16, %s17, %s18, %s19
  %s21 = sld [smem:[#allocation0]]
  $region98: #{tpu_custom_call.1} parent=0
    _
  %s23 = ssub.s32 1, %s21
  %s24 = scalar_select 0, %s23, %s21
  %25 = sst [smem:[#allocation2]] %s0
  $region1: #{tpu_custom_call.1} parent=0
    #allocation3 [shape = 'u8[4096]{0}', space=vmem, size = 0x1000, scoped, tag = 'output window, operand 0, single buffered']
    #allocation4 [shape = 's32[1]{0}', space=sflag, size = 0x4, scoped, tag = 'scoped memory for tpu_custom_call.1']
    #allocation5 [shape = 'u8[4096]{0}', space=vmem, size = 0x1000, scoped, tag = 'output window, operand 2, single buffered']
    #allocation6 [shape = 's32[1]{0}', space=sflag, size = 0x4, scoped, tag = 'scoped memory for tpu_custom_call.1']
    %26 = vsyncpa [#allocation4], 0
    %27 = vsyncpa [#allocation6], 0
    // Predicated region
    $region2: #{tpu_custom_call.1} parent=1 // pred_check
      _
    $region3: #{tpu_custom_call.1} parent=1 // pred_check_branch
      %29 = sbr.rel (0) target = $region5
    $region4: #{tpu_custom_call.1} parent=1 // pred_region
      _
    $region5: #{tpu_custom_call.1} parent=1 // pred_fallthru
      _
    // Predicated region
    $region6: #{tpu_custom_call.1} parent=1 // pred_check
      _
    $region7: #{tpu_custom_call.1} parent=1 // pred_check_branch
      %31 = sbr.rel (0) target = $region9
    $region8: #{tpu_custom_call.1} parent=1 // pred_region
      _
    $region9: #{tpu_custom_call.1} parent=1 // pred_fallthru
      _
    // Predicated region
    $region10: #{tpu_custom_call.1} parent=1 // pred_check
      _
    $region11: #{tpu_custom_call.1} parent=1 // pred_check_branch
      %33 = sbr.rel (0) target = $region13
    $region12: #{tpu_custom_call.1} parent=1 // pred_region
      _
    $region13: #{tpu_custom_call.1} parent=1 // pred_fallthru
      _
    // Predicated region
    $region14: #{tpu_custom_call.1} parent=1 // pred_check
      _
    $region15: #{tpu_custom_call.1} parent=1 // pred_check_branch
      %35 = sbr.rel (0) target = $region17
    $region16: #{tpu_custom_call.1} parent=1 // pred_region
      _
    $region17: #{tpu_custom_call.1} parent=1 // pred_fallthru
      _
    // Predicated region
    $region18: #{tpu_custom_call.1} parent=1 // pred_check
      _
    $region19: #{tpu_custom_call.1} parent=1 // pred_check_branch
      %37 = sbr.rel (0) target = $region21
    $region20: #{tpu_custom_call.1} parent=1 // pred_region
      _
    $region21: #{tpu_custom_call.1} parent=1 // pred_fallthru
      _
    // Predicated region
    $region22: #{tpu_custom_call.1} parent=1 // pred_check
      _
    $region23: #{tpu_custom_call.1} parent=1 // pred_check_branch
      %39 = sbr.rel (0) target = $region25
    $region24: #{tpu_custom_call.1} parent=1 // pred_region
      _
    $region25: #{tpu_custom_call.1} parent=1 // pred_fallthru
      _
    // Predicated region
    $region26: #{tpu_custom_call.1} parent=1 // pred_check
      _
    $region27: #{tpu_custom_call.1} parent=1 // pred_check_branch
      %41 = sbr.rel (0) target = $region29
    $region28: #{tpu_custom_call.1} parent=1 // pred_region
      _
    $region29: #{tpu_custom_call.1} parent=1 // pred_fallthru
      _
    // Predicated region
    $region30: #{tpu_custom_call.1} parent=1 // pred_check
      _
    $region31: #{tpu_custom_call.1} parent=1 // pred_check_branch
      %43 = sbr.rel (0) target = $region33
    $region32: #{tpu_custom_call.1} parent=1 // pred_region
      _
    $region33: #{tpu_custom_call.1} parent=1 // pred_fallthru
      _
    // Predicated region
    $region34: #{tpu_custom_call.1} parent=1 // pred_check
      _
    $region35: #{tpu_custom_call.1} parent=1 // pred_check_branch
      %45 = sbr.rel (0) target = $region37
    $region36: #{tpu_custom_call.1} parent=1 // pred_region
      _
    $region37: #{tpu_custom_call.1} parent=1 // pred_fallthru
      _
    // Predicated region
    $region38: #{tpu_custom_call.1} parent=1 // pred_check
      _
    $region39: #{tpu_custom_call.1} parent=1 // pred_check_branch
      %47 = sbr.rel (0) target = $region41
    $region40: #{tpu_custom_call.1} parent=1 // pred_region
      _
    $region41: #{tpu_custom_call.1} parent=1 // pred_fallthru
      _
    // Predicated region
    $region42: #{tpu_custom_call.1} parent=1 // pred_check
      _
    $region43: #{tpu_custom_call.1} parent=1 // pred_check_branch
      %49 = sbr.rel (0) target = $region45
    $region44: #{tpu_custom_call.1} parent=1 // pred_region
      _
    $region45: #{tpu_custom_call.1} parent=1 // pred_fallthru
      _
    // Predicated region
    $region46: #{tpu_custom_call.1} parent=1 // pred_check
      _
    $region47: #{tpu_custom_call.1} parent=1 // pred_check_branch
      %51 = sbr.rel (0) target = $region49
    $region48: #{tpu_custom_call.1} parent=1 // pred_region
      _
    $region49: #{tpu_custom_call.1} parent=1 // pred_fallthru
      _
    // Predicated region
    $region50: #{tpu_custom_call.1} parent=1 // pred_check
      _
    $region51: #{tpu_custom_call.1} parent=1 // pred_check_branch
      %53 = sbr.rel (0) target = $region53
    $region52: #{tpu_custom_call.1} parent=1 // pred_region
      _
    $region53: #{tpu_custom_call.1} parent=1 // pred_fallthru
      _
    // Predicated region
    $region54: #{tpu_custom_call.1} parent=1 // pred_check
      _
    $region55: #{tpu_custom_call.1} parent=1 // pred_check_branch
      %55 = sbr.rel (0) target = $region57
    $region56: #{tpu_custom_call.1} parent=1 // pred_region
      _
    $region57: #{tpu_custom_call.1} parent=1 // pred_fallthru
      _
    // Predicated region
    $region58: #{tpu_custom_call.1} parent=1 // pred_check
      _
    $region59: #{tpu_custom_call.1} parent=1 // pred_check_branch
      %57 = sbr.rel (0) target = $region61
    $region60: #{tpu_custom_call.1} parent=1 // pred_region
      _
    $region61: #{tpu_custom_call.1} parent=1 // pred_fallthru
      _
    // Predicated region
    $region62: #{tpu_custom_call.1} parent=1 // pred_check
      _
    $region63: #{tpu_custom_call.1} parent=1 // pred_check_branch
      %59 = sbr.rel (0) target = $region65
    $region64: #{tpu_custom_call.1} parent=1 // pred_region
      _
    $region65: #{tpu_custom_call.1} parent=1 // pred_fallthru
      _
    %v61 = vld [vmem:[%s1] sm:$0xff]
    %v62 = vlaneseq
    %v63 = vand.u32 %v62, 127
    %s64 = sld [smem:[#allocation2]]
    %v65 = vstv %s64
    %vm66 = vcmp.eq.s32.totalorder %v63, %v65
    %v67 = vsel %vm66, %v61, 0.0
    %vm68 = vcmask 130048
    %v69 = vsel %vm68, %v67, 0.0
    %70 = vadd.xlane.f32.xlu0 %v69
    %v71 = vpop.xlane.xlu0 %70
    %vm72 = vcmask 7168
    %73 = vst.msk [vmem:[%s17] sm:$0xff] %vm72, %v71
    %v74 = vsel %vm66, 0.0, %v61
    %v75 = vsel %vm68, %v74, 0.0
    %v76 = vrot.slane %v75, 4
    %v77 = vadd.f32 %v75, %v76
    %v78 = vrot.slane %v77, 2
    %v79 = vadd.f32 %v77, %v78
    %v80 = vrot.slane %v79, 1
    %v81 = vadd.f32 %v79, %v80
    %v82 = vrcp.pop 8.0
    %v83 = vmul.f32 %v81, %v82
    %v84 = vmul.f32 %v74, %v74
    %v85 = vsel %vm68, %v84, 0.0
    %v86 = vrot.slane %v85, 4
    %v87 = vadd.f32 %v85, %v86
    %v88 = vrot.slane %v87, 2
    %v89 = vadd.f32 %v87, %v88
    %v90 = vrot.slane %v89, 1
    %v91 = vadd.f32 %v89, %v90
    %v92 = vmul.f32 %v91, %v82
    %v93 = vmul.f32 %v83, %v83
    %v94 = vsub.f32 %v92, %v93
    %v95 = vmax.f32 %v94, 0.0
    %v96 = vsub.f32 %v74, %v83
    %v97 = vadd.f32 %v95, 1e-05
    %v98 = vrsqrt.pop %v97
    %v99 = vmul.f32 %v96, %v98
    %v100 = vld [vmem:[%s2] sm:$0xf]
    %v101 = vpack.c.bf16 %v99, %v99
    %v102 = vld [vmem:[%s4] sm:$0xf]
    %v103 = vld [vmem:[%s4 + $0x4] sm:$0xf]
    %v104 = vld [vmem:[%s5] sm:$0x1]
    %v106 = vlaneseq
    %v107 = vshrl.u32 %v106, 7
    %v108 = vsub.s32 0, %v107
    %v109 = vrot.slane %v104, %v108
    %v113 = vunpack.c.l.b16 %v102
    %v114 = vunpack.c.l.b16 %v103
    %v115 = vpack.c.b16 %v114, %v113
    %v118 = vsel %vm68, %v101, 0
    %120 = vmatprep.subr.bf16.mxu0 0
    %121 = vmatpush1.bf16.msra.mxu0 0
    %122 = vmatprep.subr.bf16.mxu0 0
    %123 = vmatpush1.bf16.msra.mxu0 0
    %124 = vmatprep.subr.bf16.mxu0 0
    %125 = vmatpush1.bf16.msra.mxu0 0
    %126 = vmatprep.subr.bf16.mxu0 0
    %127 = vmatpush1.bf16.msra.mxu0 0
    %128 = vmatprep.subr.bf16.mxu0 0
    %129 = vmatpush1.bf16.msra.mxu0 0
    %130 = vmatprep.subr.bf16.mxu0 0
    %131 = vmatpush1.bf16.msra.mxu0 0
    %132 = vmatprep.subr.bf16.mxu0 0
    %133 = vmatpush1.bf16.msra.mxu0 0
    %134 = vmatprep.subr.bf16.mxu0 0
    %135 = vmatpush1.bf16.msra.mxu0 %v115
    %136 = vmatprep.subr.bf16.mxu0 0
    %137 = vmatpush2.bf16.msra.mxu0 0
    %138 = vmatprep.subr.bf16.mxu0 0
    %139 = vmatpush2.bf16.msra.mxu0 0
    %140 = vmatprep.subr.bf16.mxu0 0
    %141 = vmatpush2.bf16.msra.mxu0 0
    %142 = vmatprep.subr.bf16.mxu0 0
    %143 = vmatpush2.bf16.msra.mxu0 0
    %144 = vmatprep.subr.bf16.mxu0 0
    %145 = vmatpush2.bf16.msra.mxu0 0
    %146 = vmatprep.subr.bf16.mxu0 0
    %147 = vmatpush2.bf16.msra.mxu0 0
    %148 = vmatprep.subr.bf16.mxu0 0
    %149 = vmatpush2.bf16.msra.mxu0 0
    %150 = vmatprep.subr.bf16.mxu0 0
    %151 = vmatpush2.bf16.msra.mxu0 0
    %152 = vmatprep.mubr.bf16.mxu0 0
    %153 = vmatmul.mubr.bf16.gmra.mxu0 %v118
    %v154 = vpop.f32.mrf.mxu0
    %v155 = vadd.f32 %v109, %v154
    %v156 = vpop.f32.mrf.mxu0
    %v157 = vpop.f32.mrf.mxu0
    %v158 = vpop.f32.mrf.mxu0
    %159 = vdwg.mxu0
    %v160 = vpack.c.bf16 %v155, %v155
    %vm161 = vcmask 64512
    %v163 = vsel %vm161, %v100, 0
    %vm165 = vcmask 1043456
    %v167 = vsel %vm165, %v160, 0
    %169 = vmatprep.subr.bf16.mxu0 0
    %170 = vmatpush1.bf16.msra.mxu0 0
    %171 = vmatprep.subr.bf16.mxu0 0
    %172 = vmatpush1.bf16.msra.mxu0 0
    %173 = vmatprep.subr.bf16.mxu0 0
    %174 = vmatpush1.bf16.msra.mxu0 0
    %175 = vmatprep.subr.bf16.mxu0 0
    %176 = vmatpush1.bf16.msra.mxu0 0
    %177 = vmatprep.subr.bf16.mxu0 0
    %178 = vmatpush1.bf16.msra.mxu0 0
    %179 = vmatprep.subr.bf16.mxu0 0
    %180 = vmatpush1.bf16.msra.mxu0 0
    %181 = vmatprep.subr.bf16.mxu0 0
    %182 = vmatpush1.bf16.msra.mxu0 0
    %183 = vmatprep.subr.bf16.mxu0 0
    %184 = vmatpush1.bf16.msra.mxu0 %v167
    %185 = vmatprep.subr.bf16.mxu0 0
    %186 = vmatpush2.bf16.msra.mxu0 0
    %187 = vmatprep.subr.bf16.mxu0 0
    %188 = vmatpush2.bf16.msra.mxu0 0
    %189 = vmatprep.subr.bf16.mxu0 0
    %190 = vmatpush2.bf16.msra.mxu0 0
    %191 = vmatprep.subr.bf16.mxu0 0
    %192 = vmatpush2.bf16.msra.mxu0 0
    %193 = vmatprep.subr.bf16.mxu0 0
    %194 = vmatpush2.bf16.msra.mxu0 0
    %195 = vmatprep.subr.bf16.mxu0 0
    %196 = vmatpush2.bf16.msra.mxu0 0
    %197 = vmatprep.subr.bf16.mxu0 0
    %198 = vmatpush2.bf16.msra.mxu0 0
    %199 = vmatprep.subr.bf16.mxu0 0
    %200 = vmatpush2.bf16.msra.mxu0 0
    %201 = vmatprep.mubr.bf16.mxu0 0
    %202 = vmatmul.mubr.bf16.gmra.mxu0 %v163
    %v203 = vpop.f32.mrf.mxu0
    %v204 = vadd.f32 0.0, %v203
    %v205 = vpop.f32.mrf.mxu0
    %v206 = vpop.f32.mrf.mxu0
    %v207 = vpop.f32.mrf.mxu0
    %208 = vdwg.mxu0
    %v209 = vmax.f32 %v204, 0.0
    %v210 = vld [vmem:[%s7] sm:$0x1]
    %v211 = vld [vmem:[%s8] sm:$0x1]
    %vm212 = vcmask 523264
    %v213 = vsel %vm212, %v209, 0.0
    %v214 = vrot.slane %v213, 4
    %v215 = vadd.f32 %v213, %v214
    %v216 = vrot.slane %v215, 2
    %v217 = vadd.f32 %v215, %v216
    %v218 = vrot.slane %v217, 1
    %v219 = vadd.f32 %v217, %v218
    %v220 = vmul.f32 %v219, %v82
    %v221 = vmul.f32 %v209, %v209
    %v222 = vsel %vm212, %v221, 0.0
    %v223 = vrot.slane %v222, 4
    %v224 = vadd.f32 %v222, %v223
    %v225 = vrot.slane %v224, 2
    %v226 = vadd.f32 %v224, %v225
    %v227 = vrot.slane %v226, 1
    %v228 = vadd.f32 %v226, %v227
    %v229 = vmul.f32 %v228, %v82
    %v230 = vmul.f32 %v220, %v220
    %v231 = vsub.f32 %v229, %v230
    %v232 = vmax.f32 %v231, 0.0
    %v233 = vsub.f32 %v209, %v220
    %v234 = vadd.f32 %v232, 1e-05
    %v235 = vrsqrt.pop %v234
    %v236 = vmul.f32 %v233, %v235
    %v238 = vlaneseq
    %v239 = vshrl.u32 %v238, 7
    %v240 = vsub.s32 0, %v239
    %v241 = vrot.slane %v210, %v240
    %v243 = vmul.f32 %v236, %v241
    %v245 = vlaneseq
    %v246 = vshrl.u32 %v245, 7
    %v247 = vsub.s32 0, %v246
    %v248 = vrot.slane %v211, %v247
    %v250 = vadd.f32 %v243, %v248
    %v251 = vpack.c.bf16 %v250, %v250
    %v252 = vld [vmem:[%s6] sm:$0xf]
    %v253 = vld [vmem:[%s6 + $0x4] sm:$0xf]
    %v254 = vld [vmem:[%s6 + $0x8] sm:$0xf]
    %v255 = vld [vmem:[%s6 + $0xc] sm:$0xf]
    %v256 = vld [vmem:[%s6 + $0x10] sm:$0xf]
    %v257 = vld [vmem:[%s6 + $0x14] sm:$0xf]
    %v258 = vld [vmem:[%s6 + $0x18] sm:$0xf]
    %v259 = vld [vmem:[%s6 + $0x1c] sm:$0xf]
    %v268 = vunpack.c.l.b16 %v252
    %v269 = vunpack.c.l.b16 %v253
    %v270 = vunpack.c.l.b16 %v254
    %v271 = vunpack.c.l.b16 %v255
    %v272 = vunpack.c.l.b16 %v256
    %v273 = vunpack.c.l.b16 %v257
    %v274 = vunpack.c.l.b16 %v258
    %v275 = vunpack.c.l.b16 %v259
    %v276 = vpack.c.b16 %v269, %v268
    %v277 = vpack.c.b16 %v271, %v270
    %v278 = vpack.c.b16 %v273, %v272
    %v279 = vpack.c.b16 %v275, %v274
    %v285 = vsel %vm212, %v251, 0
    %287 = vmatprep.subr.bf16.mxu0 0
    %288 = vmatpush1.bf16.msra.mxu0 0
    %289 = vmatprep.subr.bf16.mxu0 0
    %290 = vmatpush1.bf16.msra.mxu0 0
    %291 = vmatprep.subr.bf16.mxu0 0
    %292 = vmatpush1.bf16.msra.mxu0 0
    %293 = vmatprep.subr.bf16.mxu0 0
    %294 = vmatpush1.bf16.msra.mxu0 0
    %295 = vmatprep.subr.bf16.mxu0 0
    %296 = vmatpush1.bf16.msra.mxu0 %v279
    %297 = vmatprep.subr.bf16.mxu0 0
    %298 = vmatpush1.bf16.msra.mxu0 %v278
    %299 = vmatprep.subr.bf16.mxu0 0
    %300 = vmatpush1.bf16.msra.mxu0 %v277
    %301 = vmatprep.subr.bf16.mxu0 0
    %302 = vmatpush1.bf16.msra.mxu0 %v276
    %303 = vmatprep.subr.bf16.mxu0 0
    %304 = vmatpush2.bf16.msra.mxu0 0
    %305 = vmatprep.subr.bf16.mxu0 0
    %306 = vmatpush2.bf16.msra.mxu0 0
    %307 = vmatprep.subr.bf16.mxu0 0
    %308 = vmatpush2.bf16.msra.mxu0 0
    %309 = vmatprep.subr.bf16.mxu0 0
    %310 = vmatpush2.bf16.msra.mxu0 0
    %311 = vmatprep.subr.bf16.mxu0 0
    %312 = vmatpush2.bf16.msra.mxu0 0
    %313 = vmatprep.subr.bf16.mxu0 0
    %314 = vmatpush2.bf16.msra.mxu0 0
    %315 = vmatprep.subr.bf16.mxu0 0
    %316 = vmatpush2.bf16.msra.mxu0 0
    %317 = vmatprep.subr.bf16.mxu0 0
    %318 = vmatpush2.bf16.msra.mxu0 0
    %319 = vmatprep.mubr.bf16.mxu0 0
    %320 = vmatmul.mubr.bf16.gmra.mxu0 %v285
    %v321 = vpop.f32.mrf.mxu0
    %v322 = vadd.f32 0.0, %v321
    %v323 = vpop.f32.mrf.mxu0
    %v324 = vpop.f32.mrf.mxu0
    %v325 = vpop.f32.mrf.mxu0
    %326 = vdwg.mxu0
    %v327 = vpack.c.bf16 %v322, %v322
    %v329 = vsel %vm165, %v327, 0
    %331 = vmatprep.subr.bf16.mxu0 0
    %332 = vmatpush1.bf16.msra.mxu0 0
    %333 = vmatprep.subr.bf16.mxu0 0
    %334 = vmatpush1.bf16.msra.mxu0 0
    %335 = vmatprep.subr.bf16.mxu0 0
    %336 = vmatpush1.bf16.msra.mxu0 0
    %337 = vmatprep.subr.bf16.mxu0 0
    %338 = vmatpush1.bf16.msra.mxu0 0
    %339 = vmatprep.subr.bf16.mxu0 0
    %340 = vmatpush1.bf16.msra.mxu0 0
    %341 = vmatprep.subr.bf16.mxu0 0
    %342 = vmatpush1.bf16.msra.mxu0 0
    %343 = vmatprep.subr.bf16.mxu0 0
    %344 = vmatpush1.bf16.msra.mxu0 0
    %345 = vmatprep.subr.bf16.mxu0 0
    %346 = vmatpush1.bf16.msra.mxu0 %v329
    %347 = vmatprep.subr.bf16.mxu0 0
    %348 = vmatpush2.bf16.msra.mxu0 0
    %349 = vmatprep.subr.bf16.mxu0 0
    %350 = vmatpush2.bf16.msra.mxu0 0
    %351 = vmatprep.subr.bf16.mxu0 0
    %352 = vmatpush2.bf16.msra.mxu0 0
    %353 = vmatprep.subr.bf16.mxu0 0
    %354 = vmatpush2.bf16.msra.mxu0 0
    %355 = vmatprep.subr.bf16.mxu0 0
    %356 = vmatpush2.bf16.msra.mxu0 0
    %357 = vmatprep.subr.bf16.mxu0 0
    %358 = vmatpush2.bf16.msra.mxu0 0
    %359 = vmatprep.subr.bf16.mxu0 0
    %360 = vmatpush2.bf16.msra.mxu0 0
    %361 = vmatprep.subr.bf16.mxu0 0
    %362 = vmatpush2.bf16.msra.mxu0 0
    %363 = vmatprep.mubr.bf16.mxu0 0
    %364 = vmatmul.mubr.bf16.gmra.mxu0 %v163
    %v365 = vpop.f32.mrf.mxu0
    %v366 = vadd.f32 0.0, %v365
    %v367 = vpop.f32.mrf.mxu0
    %v368 = vpop.f32.mrf.mxu0
    %v369 = vpop.f32.mrf.mxu0
    %370 = vdwg.mxu0
    %v371 = vld [vmem:[%s9] sm:$0x1]
    %v372 = vld [vmem:[%s10] sm:$0x1]
    %v373 = vrot.slane %v366, 4
    %v374 = vadd.f32 %v366, %v373
    %v375 = vrot.slane %v374, 2
    %v376 = vadd.f32 %v374, %v375
    %v377 = vrot.slane %v376, 1
    %v378 = vadd.f32 %v376, %v377
    %v379 = vmul.f32 %v378, %v82
    %v380 = vmul.f32 %v366, %v366
    %v381 = vrot.slane %v380, 4
    %v382 = vadd.f32 %v380, %v381
    %v383 = vrot.slane %v382, 2
    %v384 = vadd.f32 %v382, %v383
    %v385 = vrot.slane %v384, 1
    %v386 = vadd.f32 %v384, %v385
    %v387 = vmul.f32 %v386, %v82
    %v388 = vmul.f32 %v379, %v379
    %v389 = vsub.f32 %v387, %v388
    %v390 = vmax.f32 %v389, 0.0
    %v391 = vsub.f32 %v366, %v379
    %v392 = vadd.f32 %v390, 1e-05
    %v393 = vrsqrt.pop %v392
    %v394 = vmul.f32 %v391, %v393
    %v396 = vlaneseq
    %v397 = vshrl.u32 %v396, 7
    %v398 = vsub.s32 0, %v397
    %v399 = vrot.slane %v371, %v398
    %v401 = vmul.f32 %v394, %v399
    %v403 = vlaneseq
    %v404 = vshrl.u32 %v403, 7
    %v405 = vsub.s32 0, %v404
    %v406 = vrot.slane %v372, %v405
    %v408 = vadd.f32 %v401, %v406
    %v409 = vld [vmem:[%s3] sm:$0xff]
    %v410 = vmul.f32 %v408, 0.5
    %v411 = vmul.f32 %v410, 1.442695
    %v412 = vpow.pop %v411
    %414 = vrot.lane.b32.xlu0 %v412, 64
    %v415 = vpop.permute.xlu0 %414
    %v417 = vmul.f32 %v409, %v415
    %v418 = vadd.f32 %v417, %v408
    %419 = vst.msk [vmem:[#allocation3] sm:$0xff] %vm212, %v418
    %v420 = vld [vmem:[%s11] sm:$0xff]
    %v421 = vld [vmem:[%s11 + $0x8] sm:$0xff]
    %v422 = vld [vmem:[%s11 + $0x10] sm:$0xff]
    %v423 = vld [vmem:[%s11 + $0x18] sm:$0xff]
    %v424 = vld [vmem:[%s12] sm:$0x1]
    %v426 = vlaneseq
    %v427 = vshrl.u32 %v426, 7
    %v428 = vsub.s32 0, %v427
    %v429 = vrot.slane %v424, %v428
    %v431 = vmul.f32 %v71, %v429
    %433 = vrot.lane.b32.xlu0 %v418, 96
    %v434 = vpop.permute.xlu0 %433
    %vm435 = vcmask 261120
    %v436 = vsel %vm435, %v434, 0
    %438 = vmatprep.subr.mxu0 0.0
    %439 = vmatpush1.msra.mxu0 0.0
    %440 = vmatprep.subr.mxu0 0.0
    %441 = vmatpush1.msra.mxu0 0.0
    %442 = vmatprep.subr.mxu0 0.0
    %443 = vmatpush1.msra.mxu0 0.0
    %444 = vmatprep.subr.mxu0 0.0
    %445 = vmatpush1.msra.mxu0 0.0
    %446 = vmatprep.subr.mxu0 0.0
    %447 = vmatpush1.msra.mxu0 0.0
    %448 = vmatprep.subr.mxu0 0.0
    %449 = vmatpush1.msra.mxu0 0.0
    %450 = vmatprep.subr.mxu0 0.0
    %451 = vmatpush1.msra.mxu0 0.0
    %452 = vmatprep.subr.mxu0 0.0
    %453 = vmatpush1.msra.mxu0 0.0
    %454 = vmatprep.subr.mxu0 0.0
    %455 = vmatpush1.msra.mxu0 0.0
    %456 = vmatprep.subr.mxu0 0.0
    %457 = vmatpush1.msra.mxu0 0.0
    %458 = vmatprep.subr.mxu0 0.0
    %459 = vmatpush1.msra.mxu0 0.0
    %460 = vmatprep.subr.mxu0 0.0
    %461 = vmatpush1.msra.mxu0 0.0
    %462 = vmatprep.subr.mxu0 0.0
    %463 = vmatpush1.msra.mxu0 %v423
    %464 = vmatprep.subr.mxu0 0.0
    %465 = vmatpush1.msra.mxu0 %v422
    %466 = vmatprep.subr.mxu0 0.0
    %467 = vmatpush1.msra.mxu0 %v421
    %468 = vmatprep.subr.mxu0 0.0
    %469 = vmatpush1.msra.mxu0 %v420
    %470 = vmatprep.subr.mxu0 0.0
    %471 = vmatpush2.msra.mxu0 0.0
    %472 = vmatprep.subr.mxu0 0.0
    %473 = vmatpush2.msra.mxu0 0.0
    %474 = vmatprep.subr.mxu0 0.0
    %475 = vmatpush2.msra.mxu0 0.0
    %476 = vmatprep.subr.mxu0 0.0
    %477 = vmatpush2.msra.mxu0 0.0
    %478 = vmatprep.subr.mxu0 0.0
    %479 = vmatpush2.msra.mxu0 0.0
    %480 = vmatprep.subr.mxu0 0.0
    %481 = vmatpush2.msra.mxu0 0.0
    %482 = vmatprep.subr.mxu0 0.0
    %483 = vmatpush2.msra.mxu0 0.0
    %484 = vmatprep.subr.mxu0 0.0
    %485 = vmatpush2.msra.mxu0 0.0
    %486 = vmatprep.subr.mxu0 0.0
    %487 = vmatpush2.msra.mxu0 0.0
    %488 = vmatprep.subr.mxu0 0.0
    %489 = vmatpush2.msra.mxu0 0.0
    %490 = vmatprep.subr.mxu0 0.0
    %491 = vmatpush2.msra.mxu0 0.0
    %492 = vmatprep.subr.mxu0 0.0
    %493 = vmatpush2.msra.mxu0 0.0
    %494 = vmatprep.subr.mxu0 0.0
    %495 = vmatpush2.msra.mxu0 0.0
    %496 = vmatprep.subr.mxu0 0.0
    %497 = vmatpush2.msra.mxu0 0.0
    %498 = vmatprep.subr.mxu0 0.0
    %499 = vmatpush2.msra.mxu0 0.0
    %500 = vmatprep.subr.mxu0 0.0
    %501 = vmatpush2.msra.mxu0 0.0
    %502 = vmatprep.mubr.f32.mxu0 0.0
    %503 = vmatmul.mubr.f32.gmra.mxu0 %v436
    %v504 = vpop.f32.mrf.mxu0
    %v505 = vadd.f32 %v431, %v504
    %v506 = vpop.f32.mrf.mxu0
    %507 = vdwg.mxu0
    %v508 = vld [vmem:[%s13] sm:$0x1]
    %v510 = vlaneseq
    %v511 = vshrl.u32 %v510, 7
    %v512 = vsub.s32 0, %v511
    %v513 = vrot.slane %v508, %v512
    %v515 = vadd.f32 %v505, %v513
    %516 = vst.msk [vmem:[#allocation5] sm:$0xff] %vm68, %v515
    %v517 = vld [vmem:[%s14] sm:$0xff]
    %v518 = vld [vmem:[%s14 + $0x8] sm:$0xff]
    %v519 = vld [vmem:[%s14 + $0x10] sm:$0xff]
    %v520 = vld [vmem:[%s14 + $0x18] sm:$0xff]
    %v521 = vld [vmem:[%s14 + $0x20] sm:$0xff]
    %v522 = vld [vmem:[%s14 + $0x28] sm:$0xff]
    %v523 = vld [vmem:[%s14 + $0x30] sm:$0xff]
    %v524 = vld [vmem:[%s14 + $0x38] sm:$0xff]
    %v525 = vld [vmem:[%s15] sm:$0x1]
    %v527 = vlaneseq
    %v528 = vshrl.u32 %v527, 7
    %v529 = vsub.s32 0, %v528
    %v530 = vrot.slane %v525, %v529
    %v532 = vsel %vm212, %v418, 0
    %534 = vmatprep.subr.mxu0 0.0
    %535 = vmatpush1.msra.mxu0 0.0
    %536 = vmatprep.subr.mxu0 0.0
    %537 = vmatpush1.msra.mxu0 0.0
    %538 = vmatprep.subr.mxu0 0.0
    %539 = vmatpush1.msra.mxu0 0.0
    %540 = vmatprep.subr.mxu0 0.0
    %541 = vmatpush1.msra.mxu0 0.0
    %542 = vmatprep.subr.mxu0 0.0
    %543 = vmatpush1.msra.mxu0 0.0
    %544 = vmatprep.subr.mxu0 0.0
    %545 = vmatpush1.msra.mxu0 0.0
    %546 = vmatprep.subr.mxu0 0.0
    %547 = vmatpush1.msra.mxu0 0.0
    %548 = vmatprep.subr.mxu0 0.0
    %549 = vmatpush1.msra.mxu0 0.0
    %550 = vmatprep.subr.mxu0 0.0
    %551 = vmatpush1.msra.mxu0 %v524
    %552 = vmatprep.subr.mxu0 0.0
    %553 = vmatpush1.msra.mxu0 %v523
    %554 = vmatprep.subr.mxu0 0.0
    %555 = vmatpush1.msra.mxu0 %v522
    %556 = vmatprep.subr.mxu0 0.0
    %557 = vmatpush1.msra.mxu0 %v521
    %558 = vmatprep.subr.mxu0 0.0
    %559 = vmatpush1.msra.mxu0 %v520
    %560 = vmatprep.subr.mxu0 0.0
    %561 = vmatpush1.msra.mxu0 %v519
    %562 = vmatprep.subr.mxu0 0.0
    %563 = vmatpush1.msra.mxu0 %v518
    %564 = vmatprep.subr.mxu0 0.0
    %565 = vmatpush1.msra.mxu0 %v517
    %566 = vmatprep.subr.mxu0 0.0
    %567 = vmatpush2.msra.mxu0 0.0
    %568 = vmatprep.subr.mxu0 0.0
    %569 = vmatpush2.msra.mxu0 0.0
    %570 = vmatprep.subr.mxu0 0.0
    %571 = vmatpush2.msra.mxu0 0.0
    %572 = vmatprep.subr.mxu0 0.0
    %573 = vmatpush2.msra.mxu0 0.0
    %574 = vmatprep.subr.mxu0 0.0
    %575 = vmatpush2.msra.mxu0 0.0
    %576 = vmatprep.subr.mxu0 0.0
    %577 = vmatpush2.msra.mxu0 0.0
    %578 = vmatprep.subr.mxu0 0.0
    %579 = vmatpush2.msra.mxu0 0.0
    %580 = vmatprep.subr.mxu0 0.0
    %581 = vmatpush2.msra.mxu0 0.0
    %582 = vmatprep.subr.mxu0 0.0
    %583 = vmatpush2.msra.mxu0 0.0
    %584 = vmatprep.subr.mxu0 0.0
    %585 = vmatpush2.msra.mxu0 0.0
    %586 = vmatprep.subr.mxu0 0.0
    %587 = vmatpush2.msra.mxu0 0.0
    %588 = vmatprep.subr.mxu0 0.0
    %589 = vmatpush2.msra.mxu0 0.0
    %590 = vmatprep.subr.mxu0 0.0
    %591 = vmatpush2.msra.mxu0 0.0
    %592 = vmatprep.subr.mxu0 0.0
    %593 = vmatpush2.msra.mxu0 0.0
    %594 = vmatprep.subr.mxu0 0.0
    %595 = vmatpush2.msra.mxu0 0.0
    %596 = vmatprep.subr.mxu0 0.0
    %597 = vmatpush2.msra.mxu0 0.0
    %598 = vmatprep.mubr.f32.mxu0 0.0
    %599 = vmatmul.mubr.f32.gmra.mxu0 %v532
    %v600 = vpop.f32.mrf.mxu0
    %v601 = vadd.f32 %v530, %v600
    %v602 = vpop.f32.mrf.mxu0
    %603 = vdwg.mxu0
    %vm604 = vcmask 31744
    %v605 = vsel %vm604, %v601, -inf
    %606 = vmax.xlane.f32.xlu0 %v605
    %v607 = vpop.xlane.xlu0 %606
    %v608 = vsub.f32 %v601, %v607
    %v609 = vmul.f32 %v608, 1.442695
    %v610 = vpow.pop %v609
    %v611 = vsel %vm604, %v610, 0.0
    %612 = vadd.xlane.f32.xlu0 %v611
    %v613 = vpop.xlane.xlu0 %612
    %v614 = vrcp.pop %v613
    %v615 = vmul.f32 %v610, %v614
    %616 = vst.msk [vmem:[%s19] sm:$0xff] %vm604, %v615
    // Predicated region
    $region66: #{tpu_custom_call.1} parent=1 // pred_check
      _
    $region67: #{tpu_custom_call.1} parent=1 // pred_check_branch
      %618 = sbr.rel (0) target = $region69
    $region68: #{tpu_custom_call.1} parent=1 // pred_region
      %s620 = ssub.s32 128, 128
      %621 = vsyncadd [#allocation4], %s620
      %s623 = sshll.u32 [#allocation3], 4
      %s624 = int_to_ptr.vmem [resolvable:$true] %s623
      %626 = dma.vmem_to_hbm [thread:$0]  %s624, 128, %s16, [#allocation4]
    $region69: #{tpu_custom_call.1} parent=1 // pred_fallthru
      _
    // Predicated region
    $region70: #{tpu_custom_call.1} parent=1 // pred_check
      _
    $region71: #{tpu_custom_call.1} parent=1 // pred_check_branch
      %628 = sbr.rel (0) target = $region73
    $region72: #{tpu_custom_call.1} parent=1 // pred_region
      _
    $region73: #{tpu_custom_call.1} parent=1 // pred_fallthru
      _
    // Predicated region
    $region74: #{tpu_custom_call.1} parent=1 // pred_check
      _
    $region75: #{tpu_custom_call.1} parent=1 // pred_check_branch
      %630 = sbr.rel (0) target = $region77
    $region76: #{tpu_custom_call.1} parent=1 // pred_region
      %s632 = ssub.s32 128, 128
      %633 = vsyncadd [#allocation6], %s632
      %s635 = sshll.u32 [#allocation5], 4
      %s636 = int_to_ptr.vmem [resolvable:$true] %s635
      %638 = dma.vmem_to_hbm [thread:$0]  %s636, 128, %s18, [#allocation6]
    $region77: #{tpu_custom_call.1} parent=1 // pred_fallthru
      _
    // Predicated region
    $region78: #{tpu_custom_call.1} parent=1 // pred_check
      _
    $region79: #{tpu_custom_call.1} parent=1 // pred_check_branch
      %640 = sbr.rel (0) target = $region81
    $region80: #{tpu_custom_call.1} parent=1 // pred_region
      _
    $region81: #{tpu_custom_call.1} parent=1 // pred_fallthru
      _
    // Predicated region
    $region82: #{tpu_custom_call.1} parent=1 // pred_check
      _
    $region83: #{tpu_custom_call.1} parent=1 // pred_check_branch
      %642 = sbr.rel (0) target = $region85
    $region84: #{tpu_custom_call.1} parent=1 // pred_region
      %643 = dma.done [#allocation4], 128
    $region85: #{tpu_custom_call.1} parent=1 // pred_fallthru
      _
    // Predicated region
    $region86: #{tpu_custom_call.1} parent=1 // pred_check
      _
    $region87: #{tpu_custom_call.1} parent=1 // pred_check_branch
      %645 = sbr.rel (0) target = $region89
    $region88: #{tpu_custom_call.1} parent=1 // pred_region
      _
    $region89: #{tpu_custom_call.1} parent=1 // pred_fallthru
      _
    // Predicated region
    $region90: #{tpu_custom_call.1} parent=1 // pred_check
      _
    $region91: #{tpu_custom_call.1} parent=1 // pred_check_branch
      %647 = sbr.rel (0) target = $region93
    $region92: #{tpu_custom_call.1} parent=1 // pred_region
      %648 = dma.done [#allocation6], 128
    $region93: #{tpu_custom_call.1} parent=1 // pred_fallthru
      _
    // Predicated region
    $region94: #{tpu_custom_call.1} parent=1 // pred_check
      _
    $region95: #{tpu_custom_call.1} parent=1 // pred_check_branch
      %650 = sbr.rel (0) target = $region97
    $region96: #{tpu_custom_call.1} parent=1 // pred_region
      _
    $region97: #{tpu_custom_call.1} parent=1 // pred_fallthru
      _
    %651 = vsyncpa [#allocation4], 1
    %652 = vsyncpa [#allocation6], 1

</llo_original>
